<compile_context>
chip_gen: v7x
topology: tpu7x:2x2x1
jax: 0.10.0
libtpu: 0.0.40
codegen_flags: <defaults>
</compile_context>

<pallas_src>
import functools

import jax
import jax.numpy as jnp
from jax import lax
from jax.experimental import pallas as pl
from jax.experimental.pallas import tpu as pltpu


# ---------------------------------------------------------------------------
# Helpers
# ---------------------------------------------------------------------------
def _round_up(n, m):
    return ((n + m - 1) // m) * m


def _pad2(a, rows, cols):
    return jnp.pad(a, ((0, rows - a.shape[0]), (0, cols - a.shape[1])))


def _buffered_supported():
    """Feature-probe for BlockSpec(pipeline_mode=pl.Buffered(n)). Only catches
    the construction-time TypeError of an unsupported kwarg; genuine lowering /
    VMEM errors at pallas_call time are NOT swallowed."""
    if not hasattr(pl, "Buffered"):
        return False
    try:
        pl.BlockSpec((8, 128), lambda i: (0, 0), pipeline_mode=pl.Buffered(1))
        return True
    except TypeError:
        return False


_BUFFERED_OK = _buffered_supported()


def _gelu(v, approximate):
    if approximate:
        # tanh-GELU lowers to the EUP (its own VLIW slot); changes numerics.
        return jax.nn.gelu(v, approximate=True)
    # PyTorch nn.GELU() default (approximate='none'): 0.5*x*(1+erf(x/sqrt(2)))
    return 0.5 * v * (1.0 + lax.erf(v * jnp.float32(0.7071067811865476)))


# ---------------------------------------------------------------------------
# Kernels
# ---------------------------------------------------------------------------
def gemini_mlp_kernel(x_ref, w1_ref, w2_ref, w3_ref, wo_ref, bh_ref, bo_ref,
                      o_ref, *, approximate_gelu: bool):
    """Multi-grid-step path: all weights resident via (single-buffered)
    grid-invariant BlockSpec blocks."""
    mm = w1_ref.dtype  # bf16 fast path or f32 exact path

    def layer(h, w, b):
        y = jnp.dot(h.astype(mm), w, preferred_element_type=jnp.float32)
        return _gelu(y + b.astype(jnp.float32), approximate_gelu)

    h = x_ref[...]
    h = layer(h, w1_ref[...], bh_ref[0:1, :])      # hidden layer 1
    h = layer(h, w2_ref[...], bh_ref[1:2, :])      # hidden layer 2
    h = layer(h, w3_ref[...], bh_ref[2:3, :])      # hidden layer 3
    out = jnp.dot(h.astype(mm), wo_ref[...],
                  preferred_element_type=jnp.float32) + bo_ref[...].astype(jnp.float32)
    o_ref[...] = out.astype(o_ref.dtype)           # lane-dense (128-padded) store


def gemini_mlp_kernel_overlap(x_ref, w1_ref, bh_ref, bo_ref,
                              w2_hbm, w3_hbm, wo_hbm, o_ref,
                              w2_buf, w3_buf, wo_buf, sem,
                              *, approximate_gelu: bool):
    """Single-grid-step (small-M, weight-HBM-bound) path: w2/w3/wo stay in HBM
    and are DMA'd into VMEM scratch while earlier layers compute, hiding most
    of the weight-fetch time behind the matmuls/GELUs."""
    cp2 = pltpu.make_async_copy(w2_hbm, w2_buf, sem.at[0])
    cp3 = pltpu.make_async_copy(w3_hbm, w3_buf, sem.at[1])
    cpo = pltpu.make_async_copy(wo_hbm, wo_buf, sem.at[2])
    cp2.start()
    cp3.start()
    cpo.start()

    mm = w1_ref.dtype

    def layer(h, w, b):
        y = jnp.dot(h.astype(mm), w, preferred_element_type=jnp.float32)
        return _gelu(y + b.astype(jnp.float32), approximate_gelu)

    h = layer(x_ref[...], w1_ref[...], bh_ref[0:1, :])   # overlaps w2/w3/wo DMA
    cp2.wait()
    h = layer(h, w2_buf[...], bh_ref[1:2, :])            # overlaps w3/wo DMA
    cp3.wait()
    h = layer(h, w3_buf[...], bh_ref[2:3, :])            # overlaps wo DMA
    cpo.wait()
    out = jnp.dot(h.astype(mm), wo_buf[...],
                  preferred_element_type=jnp.float32) + bo_ref[...].astype(jnp.float32)
    o_ref[...] = out.astype(o_ref.dtype)


# ---------------------------------------------------------------------------
# Wrapper
# ---------------------------------------------------------------------------
def pad_params(params, *, operand_dtype=jnp.bfloat16):
    """Zero-pad feature/output dims to multiples of 128 (lane-dense layout),
    cast matmul weights to `operand_dtype` (bf16 default: bf16 MXU fast path +
    half the weight HBM/VMEM; use jnp.float32 to bit-match the PyTorch module),
    and pack the three hidden biases into one (3, F_pad) f32 operand. Padding
    is exact: GELU(0) == 0 so padded columns stay 0 and are sliced off."""
    F = params["w1"].shape[0]
    O = params["wo"].shape[1]
    F_pad = _round_up(F, 128)
    O_pad = _round_up(O, 128)
    bh = jnp.concatenate([params["b1"], params["b2"], params["b3"]], axis=0)
    return {
        "w1": _pad2(params["w1"], F_pad, F_pad).astype(operand_dtype),
        "w2": _pad2(params["w2"], F_pad, F_pad).astype(operand_dtype),
        "w3": _pad2(params["w3"], F_pad, F_pad).astype(operand_dtype),
        "wo": _pad2(params["wo"], F_pad, O_pad).astype(operand_dtype),
        "bh": _pad2(bh, 3, F_pad).astype(jnp.float32),
        "bo": _pad2(params["bo"], 1, O_pad).astype(jnp.float32),
    }


def gemini_mlp(x, pp, out_features, *, tm=None, approximate_gelu=False,
               out_dtype=None):
    """x: (M, F) float32. pp: output of pad_params(). Returns (M, out_features)."""
    M, F = x.shape
    F_pad = pp["w1"].shape[0]
    O_pad = pp["wo"].shape[1]
    w_dtype = pp["w1"].dtype
    out_dtype = x.dtype if out_dtype is None else out_dtype

    # Batch tile: multiple of 16 (bf16 sublane packing), capped at 256 (fills
    # the 256-deep MXU) and at ceil(M/2) so the 'parallel' grid keeps >=2 steps
    # whenever M allows it (v7x has 2 TensorCores).
    if tm is None:
        tm = min(256, max(16, _round_up(pl.cdiv(M, 2), 16)))
    tm = max(16, _round_up(tm, 16))
    M_pad = _round_up(M, tm)
    n_steps = M_pad // tm

    # Feed x in the matmul operand dtype on the bf16 path (halves x traffic and
    # removes the in-kernel layer-1 cast); keep f32 on the exact path.
    x_pad = x
    if jnp.dtype(w_dtype) == jnp.dtype(jnp.bfloat16):
        x_pad = x_pad.astype(jnp.bfloat16)
    if (M_pad, F_pad) != (M, F):
        x_pad = jnp.pad(x_pad, ((0, M_pad - M), (0, F_pad - F)))

    w_itemsize = jnp.dtype(w_dtype).itemsize
    x_itemsize = jnp.dtype(x_pad.dtype).itemsize
    o_itemsize = jnp.dtype(out_dtype).itemsize
    weight_bytes = (3 * F_pad * F_pad + F_pad * O_pad) * w_itemsize

    # Explicit scoped-VMEM budget from the actual resident footprint:
    # weights (1 copy if single-buffered or manual-scratch, else 2) +
    # double-buffered x/out tiles + f32 activation headroom + bias blocks.
    weight_copies = 1 if (_BUFFERED_OK or n_steps == 1) else 2
    vmem_need = (weight_copies * weight_bytes
                 + 2 * tm * F_pad * x_itemsize
                 + 2 * tm * O_pad * o_itemsize
                 + 4 * tm * F_pad * 4
                 + (8 * F_pad + 8 * O_pad) * 4)
    vmem_limit_bytes = int(min(max(vmem_need + (4 << 20), 32 << 20), 128 << 20))

    flops = 2 * M_pad * (3 * F_pad * F_pad + F_pad * O_pad)
    bytes_accessed = (M_pad * F_pad * x_itemsize + weight_bytes
                      + (3 * F_pad + O_pad) * 4 + M_pad * O_pad * o_itemsize)
    cost = pl.CostEstimate(flops=flops, transcendentals=3 * M_pad * F_pad,
                           bytes_accessed=bytes_accessed)

    compiler_params = pltpu.CompilerParams(
        dimension_semantics=("parallel",),
        vmem_limit_bytes=vmem_limit_bytes)

    def rows_spec(cols):
        return pl.BlockSpec((tm, cols), lambda i: (i, 0))

    def invariant_spec(shape):
        # grid-invariant block: single-buffer when supported (halves its VMEM)
        if _BUFFERED_OK:
            return pl.BlockSpec(shape, lambda i: (0, 0),
                                pipeline_mode=pl.Buffered(1))
        return pl.BlockSpec(shape, lambda i: (0, 0))

    if n_steps == 1:
        # Small-M path: overlap w2/w3/wo DMA with layer compute.
        kernel = functools.partial(gemini_mlp_kernel_overlap,
                                   approximate_gelu=approximate_gelu)
        grid_spec = pltpu.PrefetchScalarGridSpec(
            num_scalar_prefetch=0,
            grid=(1,),
            in_specs=[
                rows_spec(F_pad),                     # x
                invariant_spec((F_pad, F_pad)),       # w1 (needed first)
                invariant_spec((3, F_pad)),           # packed b1/b2/b3
                invariant_spec((1, O_pad)),           # bo
                pl.BlockSpec(memory_space=pl.ANY),    # w2 (HBM, manual DMA)
                pl.BlockSpec(memory_space=pl.ANY),    # w3 (HBM, manual DMA)
                pl.BlockSpec(memory_space=pl.ANY),    # wo (HBM, manual DMA)
            ],
            out_specs=rows_spec(O_pad),
            scratch_shapes=[
                pltpu.VMEM((F_pad, F_pad), w_dtype),  # w2 buffer
                pltpu.VMEM((F_pad, F_pad), w_dtype),  # w3 buffer
                pltpu.VMEM((F_pad, O_pad), w_dtype),  # wo buffer
                pltpu.SemaphoreType.DMA((3,)),
            ])
        args = (x_pad, pp["w1"], pp["bh"], pp["bo"], pp["w2"], pp["w3"], pp["wo"])
    else:
        # Multi-step path: resident weights, auto-pipelined x/out tiles.
        kernel = functools.partial(gemini_mlp_kernel,
                                   approximate_gelu=approximate_gelu)
        grid_spec = pltpu.PrefetchScalarGridSpec(
            num_scalar_prefetch=0,
            grid=(n_steps,),
            in_specs=[
                rows_spec(F_pad),                     # x
                invariant_spec((F_pad, F_pad)),       # w1
                invariant_spec((F_pad, F_pad)),       # w2
                invariant_spec((F_pad, F_pad)),       # w3
                invariant_spec((F_pad, O_pad)),       # wo
                invariant_spec((3, F_pad)),           # packed b1/b2/b3
                invariant_spec((1, O_pad)),           # bo
            ],
            out_specs=rows_spec(O_pad))
        args = (x_pad, pp["w1"], pp["w2"], pp["w3"], pp["wo"], pp["bh"], pp["bo"])

    out_pad = pl.pallas_call(
        kernel,
        out_shape=jax.ShapeDtypeStruct((M_pad, O_pad), out_dtype),
        grid_spec=grid_spec,
        compiler_params=compiler_params,
        cost_estimate=cost,
    )(*args)

    return out_pad[:M, :out_features]


# ---------------------------------------------------------------------------
# Params / reference
# ---------------------------------------------------------------------------
def init_params(key, input_size, output_size):
    """Deterministic synthetic init (shapes follow GeminiMLP.__init__)."""
    ks = jax.random.split(key, 8)
    s_in = 1.0 / jnp.sqrt(jnp.float32(input_size))
    return {
        "w1": jax.random.uniform(ks[0], (input_size, input_size), jnp.float32, -s_in, s_in),
        "b1": jax.random.uniform(ks[1], (1, input_size), jnp.float32, -s_in, s_in),
        "w2": jax.random.uniform(ks[2], (input_size, input_size), jnp.float32, -s_in, s_in),
        "b2": jax.random.uniform(ks[3], (1, input_size), jnp.float32, -s_in, s_in),
        "w3": jax.random.uniform(ks[4], (input_size, input_size), jnp.float32, -s_in, s_in),
        "b3": jax.random.uniform(ks[5], (1, input_size), jnp.float32, -s_in, s_in),
        "wo": jax.random.uniform(ks[6], (input_size, output_size), jnp.float32, -s_in, s_in),
        "bo": jax.random.uniform(ks[7], (1, output_size), jnp.float32, -s_in, s_in),
    }


def gemini_mlp_ref(x, p):
    """Pure-JAX reference of the PyTorch forward (GELU exact, dropout=0)."""
    h = x
    for w, b in ((p["w1"], p["b1"]), (p["w2"], p["b2"]), (p["w3"], p["b3"])):
        h = jax.nn.gelu(h @ w + b, approximate=False)
    return h @ p["wo"] + p["bo"]


# ---------------------------------------------------------------------------
# Demo / check
# ---------------------------------------------------------------------------
if __name__ == "__main__":
    input_size = 32    # feature_size of GeminiMLP
    output_size = 16
    batch = 16

    key = jax.random.PRNGKey(0)
    kx, kp, kx2 = jax.random.split(key, 3)
    x = jax.random.normal(kx, (batch, input_size), dtype=jnp.float32)
    params = init_params(kp, input_size, output_size)
    ref = gemini_mlp_ref(x, params)

    # 1) f32 weights, small batch (single grid step -> manual DMA-overlap path).
    #    Same math as the PyTorch module (exact erf GELU).
    p_f32 = pad_params(params, operand_dtype=jnp.float32)
    out = jax.block_until_ready(gemini_mlp(x, p_f32, output_size))
    assert out.shape == (batch, output_size)
    assert jnp.allclose(out, ref, atol=1e-4, rtol=1e-4), "f32 small-batch mismatch"

    # 2) bf16 weights + bf16 input/output (MXU fast path), loose tolerance.
    p_bf16 = pad_params(params, operand_dtype=jnp.bfloat16)
    out_bf16 = jax.block_until_ready(
        gemini_mlp(x, p_bf16, output_size, out_dtype=jnp.bfloat16))
    assert out_bf16.shape == (batch, output_size)
    assert jnp.allclose(out_bf16.astype(jnp.float32), ref, atol=1e-1, rtol=1e-1), \
        "bf16 mismatch vs reference"

    # 3) Larger batch (multi-step 'parallel' grid -> resident-weight path).
    big_batch = 512
    xb = jax.random.normal(kx2, (big_batch, input_size), dtype=jnp.float32)
    refb = gemini_mlp_ref(xb, params)
    outb = jax.block_until_ready(gemini_mlp(xb, p_f32, output_size))
    assert outb.shape == (big_batch, output_size)
    assert jnp.allclose(outb, refb, atol=1e-3, rtol=1e-3), "f32 large-batch mismatch"

    print("KERNEL_OK")
</pallas_src>

<mosaic_0001>
module attributes {stable_mosaic.version = 11 : i64} {
  func.func @gemini_mlp_kernel_overlap(%arg0: i32, %arg1: memref<16x128xf32, #tpu.memory_space<vmem>>, %arg2: memref<128x128xf32, #tpu.memory_space<vmem>>, %arg3: memref<3x128xf32, #tpu.memory_space<vmem>>, %arg4: memref<1x128xf32, #tpu.memory_space<vmem>>, %arg5: memref<128x128xf32, #tpu.memory_space<any>>, %arg6: memref<128x128xf32, #tpu.memory_space<any>>, %arg7: memref<128x128xf32, #tpu.memory_space<any>>, %arg8: memref<16x128xf32, #tpu.memory_space<vmem>>, %arg9: memref<128x128xf32, #tpu.memory_space<vmem>>, %arg10: memref<128x128xf32, #tpu.memory_space<vmem>>, %arg11: memref<128x128xf32, #tpu.memory_space<vmem>>, %arg12: memref<3x!tpu.dma_semaphore, #tpu.memory_space<semaphore_mem>>) attributes {dimension_semantics = [#tpu.dimension_semantics<parallel>], iteration_bounds = array<i64: 1>, scalar_prefetch = 0 : i64, scratch_operands = 4 : i64, tpu.core_type = #tpu.core_type<tc>, window_params = [{transform_indices = @transform_0, window_bounds = array<i64: 16, 128>}, {pipeline_mode = #tpu.pipeline_mode<synchronous>, transform_indices = @transform_1, window_bounds = array<i64: 128, 128>}, {pipeline_mode = #tpu.pipeline_mode<synchronous>, transform_indices = @transform_2, window_bounds = array<i64: 3, 128>}, {pipeline_mode = #tpu.pipeline_mode<synchronous>, transform_indices = @transform_3, window_bounds = array<i64: 1, 128>}, {}, {}, {}, {transform_indices = @transform_7, window_bounds = array<i64: 16, 128>}]} {
    %c0_i32 = arith.constant 0 : i32
    %0 = tpu.memref_slice %arg12[%c0_i32] : memref<3x!tpu.dma_semaphore, #tpu.memory_space<semaphore_mem>> -> memref<1x!tpu.dma_semaphore, #tpu.memory_space<semaphore_mem>>
    %1 = tpu.memref_squeeze %0 : memref<1x!tpu.dma_semaphore, #tpu.memory_space<semaphore_mem>> -> memref<!tpu.dma_semaphore, #tpu.memory_space<semaphore_mem>>
    tpu.enqueue_dma source(%arg5 : memref<128x128xf32, #tpu.memory_space<any>>) target(%arg9 : memref<128x128xf32, #tpu.memory_space<vmem>>) target_semaphore(%1 : memref<!tpu.dma_semaphore, #tpu.memory_space<semaphore_mem>>)
    %c1_i32 = arith.constant 1 : i32
    %2 = tpu.memref_slice %arg12[%c1_i32] : memref<3x!tpu.dma_semaphore, #tpu.memory_space<semaphore_mem>> -> memref<1x!tpu.dma_semaphore, #tpu.memory_space<semaphore_mem>>
    %3 = tpu.memref_squeeze %2 : memref<1x!tpu.dma_semaphore, #tpu.memory_space<semaphore_mem>> -> memref<!tpu.dma_semaphore, #tpu.memory_space<semaphore_mem>>
    tpu.enqueue_dma source(%arg6 : memref<128x128xf32, #tpu.memory_space<any>>) target(%arg10 : memref<128x128xf32, #tpu.memory_space<vmem>>) target_semaphore(%3 : memref<!tpu.dma_semaphore, #tpu.memory_space<semaphore_mem>>)
    %c2_i32 = arith.constant 2 : i32
    %4 = tpu.memref_slice %arg12[%c2_i32] : memref<3x!tpu.dma_semaphore, #tpu.memory_space<semaphore_mem>> -> memref<1x!tpu.dma_semaphore, #tpu.memory_space<semaphore_mem>>
    %5 = tpu.memref_squeeze %4 : memref<1x!tpu.dma_semaphore, #tpu.memory_space<semaphore_mem>> -> memref<!tpu.dma_semaphore, #tpu.memory_space<semaphore_mem>>
    tpu.enqueue_dma source(%arg7 : memref<128x128xf32, #tpu.memory_space<any>>) target(%arg11 : memref<128x128xf32, #tpu.memory_space<vmem>>) target_semaphore(%5 : memref<!tpu.dma_semaphore, #tpu.memory_space<semaphore_mem>>)
    %c0 = arith.constant 0 : index
    %c0_0 = arith.constant 0 : index
    %6 = vector.load %arg1[%c0, %c0_0] : memref<16x128xf32, #tpu.memory_space<vmem>>, vector<16x128xf32>
    %c0_1 = arith.constant 0 : index
    %c0_2 = arith.constant 0 : index
    %7 = vector.load %arg2[%c0_1, %c0_2] : memref<128x128xf32, #tpu.memory_space<vmem>>, vector<128x128xf32>
    %c0_3 = arith.constant 0 : index
    %c0_4 = arith.constant 0 : index
    %8 = vector.load %arg3[%c0_3, %c0_4] : memref<3x128xf32, #tpu.memory_space<vmem>>, vector<1x128xf32>
    %cst = arith.constant dense<0.000000e+00> : vector<16x128xf32>
    %9 = tpu.matmul %6, %7, %cst {dimension_numbers = #tpu.dot_dimension_numbers<[1], [0], [0], [1], [0, 0, 1, 1], [], []>} : vector<16x128xf32>, vector<128x128xf32>, vector<16x128xf32> -> vector<16x128xf32>
    %10 = vector.broadcast %8 : vector<1x128xf32> to vector<16x128xf32>
    %11 = arith.addf %9, %10 : vector<16x128xf32>
    %cst_5 = arith.constant 5.000000e-01 : f32
    %12 = vector.broadcast %cst_5 : f32 to vector<16x128xf32>
    %13 = arith.mulf %12, %11 : vector<16x128xf32>
    %cst_6 = arith.constant 0.707106769 : f32
    %14 = vector.broadcast %cst_6 : f32 to vector<16x128xf32>
    %15 = arith.mulf %11, %14 : vector<16x128xf32>
    %16 = math.erf %15 : vector<16x128xf32>
    %cst_7 = arith.constant 1.000000e+00 : f32
    %17 = vector.broadcast %cst_7 : f32 to vector<16x128xf32>
    %18 = arith.addf %17, %16 : vector<16x128xf32>
    %19 = arith.mulf %13, %18 : vector<16x128xf32>
    %c0_i32_8 = arith.constant 0 : i32
    %20 = tpu.memref_slice %arg12[%c0_i32_8] : memref<3x!tpu.dma_semaphore, #tpu.memory_space<semaphore_mem>> -> memref<1x!tpu.dma_semaphore, #tpu.memory_space<semaphore_mem>>
    %21 = tpu.memref_squeeze %20 : memref<1x!tpu.dma_semaphore, #tpu.memory_space<semaphore_mem>> -> memref<!tpu.dma_semaphore, #tpu.memory_space<semaphore_mem>>
    tpu.wait_dma2 semaphore(%21 : memref<!tpu.dma_semaphore, #tpu.memory_space<semaphore_mem>>) src(%arg5 : memref<128x128xf32, #tpu.memory_space<any>>) dst(%arg9 : memref<128x128xf32, #tpu.memory_space<vmem>>)
    %c0_9 = arith.constant 0 : index
    %c0_10 = arith.constant 0 : index
    %22 = vector.load %arg9[%c0_9, %c0_10] : memref<128x128xf32, #tpu.memory_space<vmem>>, vector<128x128xf32>
    %c1 = arith.constant 1 : index
    %c0_11 = arith.constant 0 : index
    %23 = vector.load %arg3[%c1, %c0_11] : memref<3x128xf32, #tpu.memory_space<vmem>>, vector<1x128xf32>
    %cst_12 = arith.constant dense<0.000000e+00> : vector<16x128xf32>
    %24 = tpu.matmul %19, %22, %cst_12 {dimension_numbers = #tpu.dot_dimension_numbers<[1], [0], [0], [1], [0, 0, 1, 1], [], []>} : vector<16x128xf32>, vector<128x128xf32>, vector<16x128xf32> -> vector<16x128xf32>
    %25 = vector.broadcast %23 : vector<1x128xf32> to vector<16x128xf32>
    %26 = arith.addf %24, %25 : vector<16x128xf32>
    %cst_13 = arith.constant 5.000000e-01 : f32
    %27 = vector.broadcast %cst_13 : f32 to vector<16x128xf32>
    %28 = arith.mulf %27, %26 : vector<16x128xf32>
    %cst_14 = arith.constant 0.707106769 : f32
    %29 = vector.broadcast %cst_14 : f32 to vector<16x128xf32>
    %30 = arith.mulf %26, %29 : vector<16x128xf32>
    %31 = math.erf %30 : vector<16x128xf32>
    %cst_15 = arith.constant 1.000000e+00 : f32
    %32 = vector.broadcast %cst_15 : f32 to vector<16x128xf32>
    %33 = arith.addf %32, %31 : vector<16x128xf32>
    %34 = arith.mulf %28, %33 : vector<16x128xf32>
    %c1_i32_16 = arith.constant 1 : i32
    %35 = tpu.memref_slice %arg12[%c1_i32_16] : memref<3x!tpu.dma_semaphore, #tpu.memory_space<semaphore_mem>> -> memref<1x!tpu.dma_semaphore, #tpu.memory_space<semaphore_mem>>
    %36 = tpu.memref_squeeze %35 : memref<1x!tpu.dma_semaphore, #tpu.memory_space<semaphore_mem>> -> memref<!tpu.dma_semaphore, #tpu.memory_space<semaphore_mem>>
    tpu.wait_dma2 semaphore(%36 : memref<!tpu.dma_semaphore, #tpu.memory_space<semaphore_mem>>) src(%arg6 : memref<128x128xf32, #tpu.memory_space<any>>) dst(%arg10 : memref<128x128xf32, #tpu.memory_space<vmem>>)
    %c0_17 = arith.constant 0 : index
    %c0_18 = arith.constant 0 : index
    %37 = vector.load %arg10[%c0_17, %c0_18] : memref<128x128xf32, #tpu.memory_space<vmem>>, vector<128x128xf32>
    %c2 = arith.constant 2 : index
    %c0_19 = arith.constant 0 : index
    %38 = vector.load %arg3[%c2, %c0_19] : memref<3x128xf32, #tpu.memory_space<vmem>>, vector<1x128xf32>
    %cst_20 = arith.constant dense<0.000000e+00> : vector<16x128xf32>
    %39 = tpu.matmul %34, %37, %cst_20 {dimension_numbers = #tpu.dot_dimension_numbers<[1], [0], [0], [1], [0, 0, 1, 1], [], []>} : vector<16x128xf32>, vector<128x128xf32>, vector<16x128xf32> -> vector<16x128xf32>
    %40 = vector.broadcast %38 : vector<1x128xf32> to vector<16x128xf32>
    %41 = arith.addf %39, %40 : vector<16x128xf32>
    %cst_21 = arith.constant 5.000000e-01 : f32
    %42 = vector.broadcast %cst_21 : f32 to vector<16x128xf32>
    %43 = arith.mulf %42, %41 : vector<16x128xf32>
    %cst_22 = arith.constant 0.707106769 : f32
    %44 = vector.broadcast %cst_22 : f32 to vector<16x128xf32>
    %45 = arith.mulf %41, %44 : vector<16x128xf32>
    %46 = math.erf %45 : vector<16x128xf32>
    %cst_23 = arith.constant 1.000000e+00 : f32
    %47 = vector.broadcast %cst_23 : f32 to vector<16x128xf32>
    %48 = arith.addf %47, %46 : vector<16x128xf32>
    %49 = arith.mulf %43, %48 : vector<16x128xf32>
    %c2_i32_24 = arith.constant 2 : i32
    %50 = tpu.memref_slice %arg12[%c2_i32_24] : memref<3x!tpu.dma_semaphore, #tpu.memory_space<semaphore_mem>> -> memref<1x!tpu.dma_semaphore, #tpu.memory_space<semaphore_mem>>
    %51 = tpu.memref_squeeze %50 : memref<1x!tpu.dma_semaphore, #tpu.memory_space<semaphore_mem>> -> memref<!tpu.dma_semaphore, #tpu.memory_space<semaphore_mem>>
    tpu.wait_dma2 semaphore(%51 : memref<!tpu.dma_semaphore, #tpu.memory_space<semaphore_mem>>) src(%arg7 : memref<128x128xf32, #tpu.memory_space<any>>) dst(%arg11 : memref<128x128xf32, #tpu.memory_space<vmem>>)
    %c0_25 = arith.constant 0 : index
    %c0_26 = arith.constant 0 : index
    %52 = vector.load %arg11[%c0_25, %c0_26] : memref<128x128xf32, #tpu.memory_space<vmem>>, vector<128x128xf32>
    %cst_27 = arith.constant dense<0.000000e+00> : vector<16x128xf32>
    %53 = tpu.matmul %49, %52, %cst_27 {dimension_numbers = #tpu.dot_dimension_numbers<[1], [0], [0], [1], [0, 0, 1, 1], [], []>} : vector<16x128xf32>, vector<128x128xf32>, vector<16x128xf32> -> vector<16x128xf32>
    %c0_28 = arith.constant 0 : index
    %c0_29 = arith.constant 0 : index
    %54 = vector.load %arg4[%c0_28, %c0_29] : memref<1x128xf32, #tpu.memory_space<vmem>>, vector<1x128xf32>
    %55 = vector.broadcast %54 : vector<1x128xf32> to vector<16x128xf32>
    %56 = arith.addf %53, %55 : vector<16x128xf32>
    %c0_30 = arith.constant 0 : index
    %c0_31 = arith.constant 0 : index
    %57 = vector.load %arg8[%c0_30, %c0_31] : memref<16x128xf32, #tpu.memory_space<vmem>>, vector<16x128xf32>
    tpu.vector_store %arg8[%c0_30, %c0_31], %56 {strides = array<i32>} : memref<16x128xf32, #tpu.memory_space<vmem>>, vector<16x128xf32>,
    return
  }
  func.func @transform_0(%arg0: i32) -> (i32, i32) {
    %c0_i32 = arith.constant 0 : i32
    %c0_i32_0 = arith.constant 0 : i32
    return %arg0, %c0_i32 : i32, i32
  }
  func.func @transform_1(%arg0: i32) -> (i32, i32) {
    %c0_i32 = arith.constant 0 : i32
    %c0_i32_0 = arith.constant 0 : i32
    %c0_i32_1 = arith.constant 0 : i32
    return %c0_i32, %c0_i32_0 : i32, i32
  }
  func.func @transform_2(%arg0: i32) -> (i32, i32) {
    %c0_i32 = arith.constant 0 : i32
    %c0_i32_0 = arith.constant 0 : i32
    %c0_i32_1 = arith.constant 0 : i32
    return %c0_i32, %c0_i32_0 : i32, i32
  }
  func.func @transform_3(%arg0: i32) -> (i32, i32) {
    %c0_i32 = arith.constant 0 : i32
    %c0_i32_0 = arith.constant 0 : i32
    %c0_i32_1 = arith.constant 0 : i32
    return %c0_i32, %c0_i32_0 : i32, i32
  }
  func.func @transform_7(%arg0: i32) -> (i32, i32) {
    %c0_i32 = arith.constant 0 : i32
    %c0_i32_0 = arith.constant 0 : i32
    return %arg0, %c0_i32 : i32, i32
  }
}

</mosaic_0001>

<llo_original>
// kernel: tpu_custom_call.1
$region0: #{tpu_custom_call.1}
  #allocation0 [shape = 'u32[]', space=smem, size = 0x4, offset = 0x4, fixed_abs, tag = 'smem constant byte address 0x4 - core index']
  #allocation1 [shape = 'u32[144,128]{1,0:T(1,128)}', space=vmem, size = 0x12000, scoped, tag = 'internal scratch']
  #allocation2 [shape = 'f32[128,128]{1,0:T(8,128)}', space=vmem, size = 0x10000, scoped, tag = 'scratch operand']
  #allocation3 [shape = 'f32[128,128]{1,0:T(8,128)}', space=vmem, size = 0x10000, scoped, tag = 'scratch operand']
  #allocation4 [shape = 'f32[128,128]{1,0:T(8,128)}', space=vmem, size = 0x10000, scoped, tag = 'scratch operand']
  #allocation5 [shape = 's32[3]{0}', space=sflag, size = 0xc, scoped, tag = 'scratch operand']
  #allocation12 [shape = 's32[]', space=sflag, size = 0x4, offset = 0, fixed_abs, tag = 'sflag constant byte address 0x0 - dummy sync flag']
  #allocation13 [shape = 's32[]', space=sflag, size = 0x4, offset = 0, fixed_abs, tag = 'sflag constant byte address 0x0 - dummy sync flag']
  #allocation14 [shape = 'u32[]', space=smem, size = 0x4, offset = 0x44, fixed_abs, tag = 'smem constant byte address 0x44 - assertion arg 0']
  #allocation15 [shape = 'u32[]', space=smem, size = 0x4, offset = 0x48, fixed_abs, tag = 'smem constant byte address 0x48 - assertion arg 1']
  #allocation16 [shape = 's32[]', space=sflag, size = 0x4, offset = 0, fixed_abs, tag = 'sflag constant byte address 0x0 - dummy sync flag']
  #allocation17 [shape = 's32[]', space=sflag, size = 0x4, offset = 0, fixed_abs, tag = 'sflag constant byte address 0x0 - dummy sync flag']
  #allocation18 [shape = 's32[]', space=sflag, size = 0x4, offset = 0, fixed_abs, tag = 'sflag constant byte address 0x0 - dummy sync flag']
  #allocation19 [shape = 's32[]', space=sflag, size = 0x4, offset = 0, fixed_abs, tag = 'sflag constant byte address 0x0 - dummy sync flag']
  %s0 = inlined_call_operand.hbm [shape: f32[16,128], index: 0, kind: input, shape index: {}]
  %s1 = inlined_call_operand.hbm [shape: f32[128,128], index: 1, kind: input, shape index: {}]
  %s2 = inlined_call_operand.vmem [shape: f32[3,128], index: 2, kind: input, shape index: {}]
  %s3 = inlined_call_operand.vmem [shape: f32[1,128], index: 3, kind: input, shape index: {}]
  %s4 = inlined_call_operand.hbm [shape: f32[128,128], index: 4, kind: input, shape index: {}]
  %s5 = inlined_call_operand.hbm [shape: f32[128,128], index: 5, kind: input, shape index: {}]
  %s6 = inlined_call_operand.hbm [shape: f32[128,128], index: 6, kind: input, shape index: {}]
  %s7 = inlined_call_operand.hbm [shape: f32[16,128], index: 7, kind: output, shape index: {}]
  %s8 = sld [smem:[#allocation0]]
  $region46: #{tpu_custom_call.1} parent=0
    _
  %s10 = ssub.s32 1, %s8
  %s11 = scalar_select 0, %s10, %s8
  $region1: #{tpu_custom_call.1} parent=0
    #allocation6 [shape = 'u8[8192]{0}', space=vmem, size = 0x2000, scoped, tag = 'input window, operand 0, single buffered']
    #allocation7 [shape = 's32[1]{0}', space=sflag, size = 0x4, scoped, tag = 'scoped memory for tpu_custom_call.1']
    #allocation8 [shape = 's32[1]{0}', space=sflag, size = 0x4, scoped, tag = 'scoped memory for tpu_custom_call.1']
    #allocation9 [shape = 'u8[65536]{0}', space=vmem, size = 0x10000, scoped, tag = 'input window, operand 1, single buffered']
    #allocation10 [shape = 's32[1]{0}', space=sflag, size = 0x4, scoped, tag = 'scoped memory for tpu_custom_call.1']
    #allocation11 [shape = 'u8[8192]{0}', space=vmem, size = 0x2000, scoped, tag = 'output window, operand 0, single buffered']
    %12 = vsyncpa [#allocation7], 0
    %13 = vsyncpa [#allocation10], 0
    %14 = vsyncpa [#allocation8], 0
    // Predicated region
    $region2: #{tpu_custom_call.1} parent=1 // pred_check
      _
    $region3: #{tpu_custom_call.1} parent=1 // pred_check_branch
      %16 = sbr.rel (0) target = $region5
    $region4: #{tpu_custom_call.1} parent=1 // pred_region
      %s18 = ssub.s32 256, 256
      %19 = vsyncadd [#allocation7], %s18
      %s20 = sshll.u32 [#allocation6], 4
      %s21 = int_to_ptr.vmem [resolvable:$true] %s20
      %26 = dma.hbm_to_vmem [thread:$0]  %s0, 256, %s21, [#allocation7], 128, 128, 8
    $region5: #{tpu_custom_call.1} parent=1 // pred_fallthru
      _
    // Predicated region
    $region6: #{tpu_custom_call.1} parent=1 // pred_check
      _
    $region7: #{tpu_custom_call.1} parent=1 // pred_check_branch
      %28 = sbr.rel (0) target = $region9
    $region8: #{tpu_custom_call.1} parent=1 // pred_region
      %s30 = ssub.s32 2048, 2048
      %31 = vsyncadd [#allocation10], %s30
      %s32 = sshll.u32 [#allocation9], 4
      %s33 = int_to_ptr.vmem [resolvable:$true] %s32
      %38 = dma.hbm_to_vmem [thread:$0]  %s1, 2048, %s33, [#allocation10], 128, 128, 8
    $region9: #{tpu_custom_call.1} parent=1 // pred_fallthru
      _
    // Predicated region
    $region10: #{tpu_custom_call.1} parent=1 // pred_check
      _
    $region11: #{tpu_custom_call.1} parent=1 // pred_check_branch
      %40 = sbr.rel (0) target = $region13
    $region12: #{tpu_custom_call.1} parent=1 // pred_region
      _
    $region13: #{tpu_custom_call.1} parent=1 // pred_fallthru
      _
    // Predicated region
    $region14: #{tpu_custom_call.1} parent=1 // pred_check
      _
    $region15: #{tpu_custom_call.1} parent=1 // pred_check_branch
      %42 = sbr.rel (0) target = $region17
    $region16: #{tpu_custom_call.1} parent=1 // pred_region
      _
    $region17: #{tpu_custom_call.1} parent=1 // pred_fallthru
      _
    // Predicated region
    $region18: #{tpu_custom_call.1} parent=1 // pred_check
      _
    $region19: #{tpu_custom_call.1} parent=1 // pred_check_branch
      %44 = sbr.rel (0) target = $region21
    $region20: #{tpu_custom_call.1} parent=1 // pred_region
      %45 = dma.done [#allocation7], 256
    $region21: #{tpu_custom_call.1} parent=1 // pred_fallthru
      _
    // Predicated region
    $region22: #{tpu_custom_call.1} parent=1 // pred_check
      _
    $region23: #{tpu_custom_call.1} parent=1 // pred_check_branch
      %47 = sbr.rel (0) target = $region25
    $region24: #{tpu_custom_call.1} parent=1 // pred_region
      %48 = dma.done [#allocation10], 2048
    $region25: #{tpu_custom_call.1} parent=1 // pred_fallthru
      _
    // Predicated region
    $region26: #{tpu_custom_call.1} parent=1 // pred_check
      _
    $region27: #{tpu_custom_call.1} parent=1 // pred_check_branch
      %50 = sbr.rel target = $region29
    $region28: #{tpu_custom_call.1} parent=1 // pred_region
      %51 = sst [smem:[#allocation14]] [#allocation13]
      %52 = sst [smem:[#allocation15]] [#allocation12]
    $region29: #{tpu_custom_call.1} parent=1 // pred_fallthru
      _
    %54 = shalt.err (0)
    %s56 = sshll.u32 [#allocation2], 4
    %s57 = int_to_ptr.vmem [resolvable:$true] %s56
    %59 = dma.hbm_to_vmem [thread:$0]  %s4, 2048, %s57, [#allocation5]
    %s60 = scalar_lea.sflag [#allocation5], 1
    // Predicated region
    $region30: #{tpu_custom_call.1} parent=1 // pred_check
      _
    $region31: #{tpu_custom_call.1} parent=1 // pred_check_branch
      %62 = sbr.rel target = $region33
    $region32: #{tpu_custom_call.1} parent=1 // pred_region
      %63 = sst [smem:[#allocation14]] [#allocation17]
      %64 = sst [smem:[#allocation15]] [#allocation16]
    $region33: #{tpu_custom_call.1} parent=1 // pred_fallthru
      _
    %66 = shalt.err (0)
    %s68 = sshll.u32 [#allocation3], 4
    %s69 = int_to_ptr.vmem [resolvable:$true] %s68
    %71 = dma.hbm_to_vmem [thread:$0]  %s5, 2048, %s69, %s60
    %s72 = scalar_lea.sflag [#allocation5], 2
    // Predicated region
    $region34: #{tpu_custom_call.1} parent=1 // pred_check
      _
    $region35: #{tpu_custom_call.1} parent=1 // pred_check_branch
      %74 = sbr.rel target = $region37
    $region36: #{tpu_custom_call.1} parent=1 // pred_region
      %75 = sst [smem:[#allocation14]] [#allocation19]
      %76 = sst [smem:[#allocation15]] [#allocation18]
    $region37: #{tpu_custom_call.1} parent=1 // pred_fallthru
      _
    %78 = shalt.err (0)
    %s80 = sshll.u32 [#allocation4], 4
    %s81 = int_to_ptr.vmem [resolvable:$true] %s80
    %83 = dma.hbm_to_vmem [thread:$0]  %s6, 2048, %s81, %s72
    %v84 = vld [vmem:[#allocation6] sm:$0xff]
    %v85 = vld [vmem:[#allocation6 + $0x8] sm:$0xff]
    %v86 = vld [vmem:[#allocation9] sm:$0xff]
    %v87 = vld [vmem:[#allocation9 + $0x8] sm:$0xff]
    %v88 = vld [vmem:[#allocation9 + $0x10] sm:$0xff]
    %v89 = vld [vmem:[#allocation9 + $0x18] sm:$0xff]
    %v90 = vld [vmem:[#allocation9 + $0x20] sm:$0xff]
    %v91 = vld [vmem:[#allocation9 + $0x28] sm:$0xff]
    %v92 = vld [vmem:[#allocation9 + $0x30] sm:$0xff]
    %v93 = vld [vmem:[#allocation9 + $0x38] sm:$0xff]
    %v94 = vld [vmem:[#allocation9 + $0x40] sm:$0xff]
    %v95 = vld [vmem:[#allocation9 + $0x48] sm:$0xff]
    %v96 = vld [vmem:[#allocation9 + $0x50] sm:$0xff]
    %v97 = vld [vmem:[#allocation9 + $0x58] sm:$0xff]
    %v98 = vld [vmem:[#allocation9 + $0x60] sm:$0xff]
    %v99 = vld [vmem:[#allocation9 + $0x68] sm:$0xff]
    %v100 = vld [vmem:[#allocation9 + $0x70] sm:$0xff]
    %v101 = vld [vmem:[#allocation9 + $0x78] sm:$0xff]
    %v102 = vld [vmem:[%s2] sm:$0x1]
    %v103 = vlaneseq
    %v104 = vshrl.u32 %v103, 7
    %v105 = vsub.s32 0, %v104
    %v106 = vrot.slane %v102, %v105
    %107 = vmatprep.subr.mxu0 0.0
    %108 = vmatpush1.msra.mxu0 %v86
    %109 = vmatprep.subr.mxu0 0.0
    %110 = vmatpush1.msra.mxu0 %v87
    %111 = vmatprep.subr.mxu0 0.0
    %112 = vmatpush1.msra.mxu0 %v88
    %113 = vmatprep.subr.mxu0 0.0
    %114 = vmatpush1.msra.mxu0 %v89
    %115 = vmatprep.subr.mxu0 0.0
    %116 = vmatpush1.msra.mxu0 %v90
    %117 = vmatprep.subr.mxu0 0.0
    %118 = vmatpush1.msra.mxu0 %v91
    %119 = vmatprep.subr.mxu0 0.0
    %120 = vmatpush1.msra.mxu0 %v92
    %121 = vmatprep.subr.mxu0 0.0
    %122 = vmatpush1.msra.mxu0 %v93
    %123 = vmatprep.subr.mxu0 0.0
    %124 = vmatpush1.msra.mxu0 %v94
    %125 = vmatprep.subr.mxu0 0.0
    %126 = vmatpush1.msra.mxu0 %v95
    %127 = vmatprep.subr.mxu0 0.0
    %128 = vmatpush1.msra.mxu0 %v96
    %129 = vmatprep.subr.mxu0 0.0
    %130 = vmatpush1.msra.mxu0 %v97
    %131 = vmatprep.subr.mxu0 0.0
    %132 = vmatpush1.msra.mxu0 %v98
    %133 = vmatprep.subr.mxu0 0.0
    %134 = vmatpush1.msra.mxu0 %v99
    %135 = vmatprep.subr.mxu0 0.0
    %136 = vmatpush1.msra.mxu0 %v100
    %137 = vmatprep.subr.mxu0 0.0
    %138 = vmatpush1.msra.mxu0 %v101
    %139 = vmatprep.subr.mxu0 0.0
    %140 = vmatpush1.msra.mxu0 0.0
    %141 = vmatprep.subr.mxu0 0.0
    %142 = vmatpush1.msra.mxu0 0.0
    %143 = vmatprep.subr.mxu0 0.0
    %144 = vmatpush1.msra.mxu0 0.0
    %145 = vmatprep.subr.mxu0 0.0
    %146 = vmatpush1.msra.mxu0 0.0
    %147 = vmatprep.subr.mxu0 0.0
    %148 = vmatpush1.msra.mxu0 0.0
    %149 = vmatprep.subr.mxu0 0.0
    %150 = vmatpush1.msra.mxu0 0.0
    %151 = vmatprep.subr.mxu0 0.0
    %152 = vmatpush1.msra.mxu0 0.0
    %153 = vmatprep.subr.mxu0 0.0
    %154 = vmatpush1.msra.mxu0 0.0
    %155 = vmatprep.subr.mxu0 0.0
    %156 = vmatpush1.msra.mxu0 0.0
    %157 = vmatprep.subr.mxu0 0.0
    %158 = vmatpush1.msra.mxu0 0.0
    %159 = vmatprep.subr.mxu0 0.0
    %160 = vmatpush1.msra.mxu0 0.0
    %161 = vmatprep.subr.mxu0 0.0
    %162 = vmatpush1.msra.mxu0 0.0
    %163 = vmatprep.subr.mxu0 0.0
    %164 = vmatpush1.msra.mxu0 0.0
    %165 = vmatprep.subr.mxu0 0.0
    %166 = vmatpush1.msra.mxu0 0.0
    %167 = vmatprep.subr.mxu0 0.0
    %168 = vmatpush1.msra.mxu0 0.0
    %169 = vmatprep.subr.mxu0 0.0
    %170 = vmatpush1.msra.mxu0 0.0
    %171 = vmatprep.mubr.f32.mxu0 0.0
    %172 = vmatmul.mubr.f32.gmra.mrb[0].mxu0 %v84
    %v173 = vpop.f32.mrb[0].mxu0
    %v174 = vadd.f32 %v106, %v173
    %v175 = vpop.f32.mrb[0].mxu0
    %176 = vmatprep.mubr.f32.mxu0 0.0
    %177 = vmatmul.mubr.f32.gmra.mrb[0].mxu0 %v85
    %v178 = vpop.f32.mrb[0].mxu0
    %v179 = vadd.f32 %v106, %v178
    %v180 = vpop.f32.mrb[0].mxu0
    %181 = vdwg.mxu0
    %v182 = vmul.f32 %v174, 0.5
    %v183 = vmul.f32 %v179, 0.5
    %v184 = vmul.f32 %v174, 0.70710677
    %v185 = vmul.f32 %v179, 0.70710677
    %v186 = verf.f32.pop %v184
    %v187 = verf.f32.pop %v185
    %v188 = vadd.f32 %v186, 1.0
    %v189 = vadd.f32 %v187, 1.0
    %v190 = vmul.f32 %v182, %v188
    %v191 = vmul.f32 %v183, %v189
    %s192 = smul.u32 128, 1
    %s193 = sshll.u32 %s192, 4
    %194 = dma.done [#allocation5], %s193
    %v195 = vld [vmem:[#allocation2] sm:$0xff]
    %v196 = vld [vmem:[#allocation2 + $0x8] sm:$0xff]
    %v197 = vld [vmem:[#allocation2 + $0x10] sm:$0xff]
    %v198 = vld [vmem:[#allocation2 + $0x18] sm:$0xff]
    %v199 = vld [vmem:[#allocation2 + $0x20] sm:$0xff]
    %v200 = vld [vmem:[#allocation2 + $0x28] sm:$0xff]
    %v201 = vld [vmem:[#allocation2 + $0x30] sm:$0xff]
    %v202 = vld [vmem:[#allocation2 + $0x38] sm:$0xff]
    %v203 = vld [vmem:[#allocation2 + $0x40] sm:$0xff]
    %v204 = vld [vmem:[#allocation2 + $0x48] sm:$0xff]
    %v205 = vld [vmem:[#allocation2 + $0x50] sm:$0xff]
    %v206 = vld [vmem:[#allocation2 + $0x58] sm:$0xff]
    %v207 = vld [vmem:[#allocation2 + $0x60] sm:$0xff]
    %v208 = vld [vmem:[#allocation2 + $0x68] sm:$0xff]
    %v209 = vld [vmem:[#allocation2 + $0x70] sm:$0xff]
    %v210 = vld [vmem:[#allocation2 + $0x78] sm:$0xff]
    %v211 = vld [vmem:[%s2 + $0x1] sm:$0x1]
    %v212 = vlaneseq
    %v213 = vshrl.u32 %v212, 7
    %v214 = vsub.s32 0, %v213
    %v215 = vrot.slane %v211, %v214
    %216 = vmatprep.subr.mxu0 0.0
    %217 = vmatpush1.msra.mxu0 %v195
    %218 = vmatprep.subr.mxu0 0.0
    %219 = vmatpush1.msra.mxu0 %v196
    %220 = vmatprep.subr.mxu0 0.0
    %221 = vmatpush1.msra.mxu0 %v197
    %222 = vmatprep.subr.mxu0 0.0
    %223 = vmatpush1.msra.mxu0 %v198
    %224 = vmatprep.subr.mxu0 0.0
    %225 = vmatpush1.msra.mxu0 %v199
    %226 = vmatprep.subr.mxu0 0.0
    %227 = vmatpush1.msra.mxu0 %v200
    %228 = vmatprep.subr.mxu0 0.0
    %229 = vmatpush1.msra.mxu0 %v201
    %230 = vmatprep.subr.mxu0 0.0
    %231 = vmatpush1.msra.mxu0 %v202
    %232 = vmatprep.subr.mxu0 0.0
    %233 = vmatpush1.msra.mxu0 %v203
    %234 = vmatprep.subr.mxu0 0.0
    %235 = vmatpush1.msra.mxu0 %v204
    %236 = vmatprep.subr.mxu0 0.0
    %237 = vmatpush1.msra.mxu0 %v205
    %238 = vmatprep.subr.mxu0 0.0
    %239 = vmatpush1.msra.mxu0 %v206
    %240 = vmatprep.subr.mxu0 0.0
    %241 = vmatpush1.msra.mxu0 %v207
    %242 = vmatprep.subr.mxu0 0.0
    %243 = vmatpush1.msra.mxu0 %v208
    %244 = vmatprep.subr.mxu0 0.0
    %245 = vmatpush1.msra.mxu0 %v209
    %246 = vmatprep.subr.mxu0 0.0
    %247 = vmatpush1.msra.mxu0 %v210
    %248 = vmatprep.subr.mxu0 0.0
    %249 = vmatpush1.msra.mxu0 0.0
    %250 = vmatprep.subr.mxu0 0.0
    %251 = vmatpush1.msra.mxu0 0.0
    %252 = vmatprep.subr.mxu0 0.0
    %253 = vmatpush1.msra.mxu0 0.0
    %254 = vmatprep.subr.mxu0 0.0
    %255 = vmatpush1.msra.mxu0 0.0
    %256 = vmatprep.subr.mxu0 0.0
    %257 = vmatpush1.msra.mxu0 0.0
    %258 = vmatprep.subr.mxu0 0.0
    %259 = vmatpush1.msra.mxu0 0.0
    %260 = vmatprep.subr.mxu0 0.0
    %261 = vmatpush1.msra.mxu0 0.0
    %262 = vmatprep.subr.mxu0 0.0
    %263 = vmatpush1.msra.mxu0 0.0
    %264 = vmatprep.subr.mxu0 0.0
    %265 = vmatpush1.msra.mxu0 0.0
    %266 = vmatprep.subr.mxu0 0.0
    %267 = vmatpush1.msra.mxu0 0.0
    %268 = vmatprep.subr.mxu0 0.0
    %269 = vmatpush1.msra.mxu0 0.0
    %270 = vmatprep.subr.mxu0 0.0
    %271 = vmatpush1.msra.mxu0 0.0
    %272 = vmatprep.subr.mxu0 0.0
    %273 = vmatpush1.msra.mxu0 0.0
    %274 = vmatprep.subr.mxu0 0.0
    %275 = vmatpush1.msra.mxu0 0.0
    %276 = vmatprep.subr.mxu0 0.0
    %277 = vmatpush1.msra.mxu0 0.0
    %278 = vmatprep.subr.mxu0 0.0
    %279 = vmatpush1.msra.mxu0 0.0
    %280 = vmatprep.mubr.f32.mxu0 0.0
    %281 = vmatmul.mubr.f32.gmra.mrb[0].mxu0 %v190
    %v282 = vpop.f32.mrb[0].mxu0
    %v283 = vadd.f32 %v215, %v282
    %v284 = vpop.f32.mrb[0].mxu0
    %285 = vmatprep.mubr.f32.mxu0 0.0
    %286 = vmatmul.mubr.f32.gmra.mrb[0].mxu0 %v191
    %v287 = vpop.f32.mrb[0].mxu0
    %v288 = vadd.f32 %v215, %v287
    %v289 = vpop.f32.mrb[0].mxu0
    %290 = vdwg.mxu0
    %v291 = vmul.f32 %v283, 0.5
    %v292 = vmul.f32 %v288, 0.5
    %v293 = vmul.f32 %v283, 0.70710677
    %v294 = vmul.f32 %v288, 0.70710677
    %v295 = verf.f32.pop %v293
    %v296 = verf.f32.pop %v294
    %v297 = vadd.f32 %v295, 1.0
    %v298 = vadd.f32 %v296, 1.0
    %v299 = vmul.f32 %v291, %v297
    %v300 = vmul.f32 %v292, %v298
    %s301 = sshll.u32 %s192, 4
    %302 = dma.done %s60, %s301
    %v303 = vld [vmem:[#allocation3] sm:$0xff]
    %v304 = vld [vmem:[#allocation3 + $0x8] sm:$0xff]
    %v305 = vld [vmem:[#allocation3 + $0x10] sm:$0xff]
    %v306 = vld [vmem:[#allocation3 + $0x18] sm:$0xff]
    %v307 = vld [vmem:[#allocation3 + $0x20] sm:$0xff]
    %v308 = vld [vmem:[#allocation3 + $0x28] sm:$0xff]
    %v309 = vld [vmem:[#allocation3 + $0x30] sm:$0xff]
    %v310 = vld [vmem:[#allocation3 + $0x38] sm:$0xff]
    %v311 = vld [vmem:[#allocation3 + $0x40] sm:$0xff]
    %v312 = vld [vmem:[#allocation3 + $0x48] sm:$0xff]
    %v313 = vld [vmem:[#allocation3 + $0x50] sm:$0xff]
    %v314 = vld [vmem:[#allocation3 + $0x58] sm:$0xff]
    %v315 = vld [vmem:[#allocation3 + $0x60] sm:$0xff]
    %v316 = vld [vmem:[#allocation3 + $0x68] sm:$0xff]
    %v317 = vld [vmem:[#allocation3 + $0x70] sm:$0xff]
    %v318 = vld [vmem:[#allocation3 + $0x78] sm:$0xff]
    %v319 = vld [vmem:[%s2 + $0x2] sm:$0x1]
    %v320 = vlaneseq
    %v321 = vshrl.u32 %v320, 7
    %v322 = vsub.s32 0, %v321
    %v323 = vrot.slane %v319, %v322
    %324 = vmatprep.subr.mxu0 0.0
    %325 = vmatpush1.msra.mxu0 %v303
    %326 = vmatprep.subr.mxu0 0.0
    %327 = vmatpush1.msra.mxu0 %v304
    %328 = vmatprep.subr.mxu0 0.0
    %329 = vmatpush1.msra.mxu0 %v305
    %330 = vmatprep.subr.mxu0 0.0
    %331 = vmatpush1.msra.mxu0 %v306
    %332 = vmatprep.subr.mxu0 0.0
    %333 = vmatpush1.msra.mxu0 %v307
    %334 = vmatprep.subr.mxu0 0.0
    %335 = vmatpush1.msra.mxu0 %v308
    %336 = vmatprep.subr.mxu0 0.0
    %337 = vmatpush1.msra.mxu0 %v309
    %338 = vmatprep.subr.mxu0 0.0
    %339 = vmatpush1.msra.mxu0 %v310
    %340 = vmatprep.subr.mxu0 0.0
    %341 = vmatpush1.msra.mxu0 %v311
    %342 = vmatprep.subr.mxu0 0.0
    %343 = vmatpush1.msra.mxu0 %v312
    %344 = vmatprep.subr.mxu0 0.0
    %345 = vmatpush1.msra.mxu0 %v313
    %346 = vmatprep.subr.mxu0 0.0
    %347 = vmatpush1.msra.mxu0 %v314
    %348 = vmatprep.subr.mxu0 0.0
    %349 = vmatpush1.msra.mxu0 %v315
    %350 = vmatprep.subr.mxu0 0.0
    %351 = vmatpush1.msra.mxu0 %v316
    %352 = vmatprep.subr.mxu0 0.0
    %353 = vmatpush1.msra.mxu0 %v317
    %354 = vmatprep.subr.mxu0 0.0
    %355 = vmatpush1.msra.mxu0 %v318
    %356 = vmatprep.subr.mxu0 0.0
    %357 = vmatpush1.msra.mxu0 0.0
    %358 = vmatprep.subr.mxu0 0.0
    %359 = vmatpush1.msra.mxu0 0.0
    %360 = vmatprep.subr.mxu0 0.0
    %361 = vmatpush1.msra.mxu0 0.0
    %362 = vmatprep.subr.mxu0 0.0
    %363 = vmatpush1.msra.mxu0 0.0
    %364 = vmatprep.subr.mxu0 0.0
    %365 = vmatpush1.msra.mxu0 0.0
    %366 = vmatprep.subr.mxu0 0.0
    %367 = vmatpush1.msra.mxu0 0.0
    %368 = vmatprep.subr.mxu0 0.0
    %369 = vmatpush1.msra.mxu0 0.0
    %370 = vmatprep.subr.mxu0 0.0
    %371 = vmatpush1.msra.mxu0 0.0
    %372 = vmatprep.subr.mxu0 0.0
    %373 = vmatpush1.msra.mxu0 0.0
    %374 = vmatprep.subr.mxu0 0.0
    %375 = vmatpush1.msra.mxu0 0.0
    %376 = vmatprep.subr.mxu0 0.0
    %377 = vmatpush1.msra.mxu0 0.0
    %378 = vmatprep.subr.mxu0 0.0
    %379 = vmatpush1.msra.mxu0 0.0
    %380 = vmatprep.subr.mxu0 0.0
    %381 = vmatpush1.msra.mxu0 0.0
    %382 = vmatprep.subr.mxu0 0.0
    %383 = vmatpush1.msra.mxu0 0.0
    %384 = vmatprep.subr.mxu0 0.0
    %385 = vmatpush1.msra.mxu0 0.0
    %386 = vmatprep.subr.mxu0 0.0
    %387 = vmatpush1.msra.mxu0 0.0
    %388 = vmatprep.mubr.f32.mxu0 0.0
    %389 = vmatmul.mubr.f32.gmra.mrb[0].mxu0 %v299
    %v390 = vpop.f32.mrb[0].mxu0
    %v391 = vadd.f32 %v323, %v390
    %v392 = vpop.f32.mrb[0].mxu0
    %393 = vmatprep.mubr.f32.mxu0 0.0
    %394 = vmatmul.mubr.f32.gmra.mrb[0].mxu0 %v300
    %v395 = vpop.f32.mrb[0].mxu0
    %v396 = vadd.f32 %v323, %v395
    %v397 = vpop.f32.mrb[0].mxu0
    %398 = vdwg.mxu0
    %v399 = vmul.f32 %v391, 0.5
    %v400 = vmul.f32 %v396, 0.5
    %v401 = vmul.f32 %v391, 0.70710677
    %v402 = vmul.f32 %v396, 0.70710677
    %v403 = verf.f32.pop %v401
    %v404 = verf.f32.pop %v402
    %v405 = vadd.f32 %v403, 1.0
    %v406 = vadd.f32 %v404, 1.0
    %v407 = vmul.f32 %v399, %v405
    %v408 = vmul.f32 %v400, %v406
    %s409 = sshll.u32 %s192, 4
    %410 = dma.done %s72, %s409
    %v411 = vld [vmem:[#allocation4] sm:$0xff]
    %v412 = vld [vmem:[#allocation4 + $0x8] sm:$0xff]
    %v413 = vld [vmem:[#allocation4 + $0x10] sm:$0xff]
    %v414 = vld [vmem:[#allocation4 + $0x18] sm:$0xff]
    %v415 = vld [vmem:[#allocation4 + $0x20] sm:$0xff]
    %v416 = vld [vmem:[#allocation4 + $0x28] sm:$0xff]
    %v417 = vld [vmem:[#allocation4 + $0x30] sm:$0xff]
    %v418 = vld [vmem:[#allocation4 + $0x38] sm:$0xff]
    %v419 = vld [vmem:[#allocation4 + $0x40] sm:$0xff]
    %v420 = vld [vmem:[#allocation4 + $0x48] sm:$0xff]
    %v421 = vld [vmem:[#allocation4 + $0x50] sm:$0xff]
    %v422 = vld [vmem:[#allocation4 + $0x58] sm:$0xff]
    %v423 = vld [vmem:[#allocation4 + $0x60] sm:$0xff]
    %v424 = vld [vmem:[#allocation4 + $0x68] sm:$0xff]
    %v425 = vld [vmem:[#allocation4 + $0x70] sm:$0xff]
    %v426 = vld [vmem:[#allocation4 + $0x78] sm:$0xff]
    %v427 = vld [vmem:[%s3] sm:$0x1]
    %v429 = vlaneseq
    %v430 = vshrl.u32 %v429, 7
    %v431 = vsub.s32 0, %v430
    %v432 = vrot.slane %v427, %v431
    %434 = vmatprep.subr.mxu0 0.0
    %435 = vmatpush1.msra.mxu0 %v411
    %436 = vmatprep.subr.mxu0 0.0
    %437 = vmatpush1.msra.mxu0 %v412
    %438 = vmatprep.subr.mxu0 0.0
    %439 = vmatpush1.msra.mxu0 %v413
    %440 = vmatprep.subr.mxu0 0.0
    %441 = vmatpush1.msra.mxu0 %v414
    %442 = vmatprep.subr.mxu0 0.0
    %443 = vmatpush1.msra.mxu0 %v415
    %444 = vmatprep.subr.mxu0 0.0
    %445 = vmatpush1.msra.mxu0 %v416
    %446 = vmatprep.subr.mxu0 0.0
    %447 = vmatpush1.msra.mxu0 %v417
    %448 = vmatprep.subr.mxu0 0.0
    %449 = vmatpush1.msra.mxu0 %v418
    %450 = vmatprep.subr.mxu0 0.0
    %451 = vmatpush1.msra.mxu0 %v419
    %452 = vmatprep.subr.mxu0 0.0
    %453 = vmatpush1.msra.mxu0 %v420
    %454 = vmatprep.subr.mxu0 0.0
    %455 = vmatpush1.msra.mxu0 %v421
    %456 = vmatprep.subr.mxu0 0.0
    %457 = vmatpush1.msra.mxu0 %v422
    %458 = vmatprep.subr.mxu0 0.0
    %459 = vmatpush1.msra.mxu0 %v423
    %460 = vmatprep.subr.mxu0 0.0
    %461 = vmatpush1.msra.mxu0 %v424
    %462 = vmatprep.subr.mxu0 0.0
    %463 = vmatpush1.msra.mxu0 %v425
    %464 = vmatprep.subr.mxu0 0.0
    %465 = vmatpush1.msra.mxu0 %v426
    %466 = vmatprep.subr.mxu0 0.0
    %467 = vmatpush1.msra.mxu0 0.0
    %468 = vmatprep.subr.mxu0 0.0
    %469 = vmatpush1.msra.mxu0 0.0
    %470 = vmatprep.subr.mxu0 0.0
    %471 = vmatpush1.msra.mxu0 0.0
    %472 = vmatprep.subr.mxu0 0.0
    %473 = vmatpush1.msra.mxu0 0.0
    %474 = vmatprep.subr.mxu0 0.0
    %475 = vmatpush1.msra.mxu0 0.0
    %476 = vmatprep.subr.mxu0 0.0
    %477 = vmatpush1.msra.mxu0 0.0
    %478 = vmatprep.subr.mxu0 0.0
    %479 = vmatpush1.msra.mxu0 0.0
    %480 = vmatprep.subr.mxu0 0.0
    %481 = vmatpush1.msra.mxu0 0.0
    %482 = vmatprep.subr.mxu0 0.0
    %483 = vmatpush1.msra.mxu0 0.0
    %484 = vmatprep.subr.mxu0 0.0
    %485 = vmatpush1.msra.mxu0 0.0
    %486 = vmatprep.subr.mxu0 0.0
    %487 = vmatpush1.msra.mxu0 0.0
    %488 = vmatprep.subr.mxu0 0.0
    %489 = vmatpush1.msra.mxu0 0.0
    %490 = vmatprep.subr.mxu0 0.0
    %491 = vmatpush1.msra.mxu0 0.0
    %492 = vmatprep.subr.mxu0 0.0
    %493 = vmatpush1.msra.mxu0 0.0
    %494 = vmatprep.subr.mxu0 0.0
    %495 = vmatpush1.msra.mxu0 0.0
    %496 = vmatprep.subr.mxu0 0.0
    %497 = vmatpush1.msra.mxu0 0.0
    %498 = vmatprep.mubr.f32.mxu0 0.0
    %499 = vmatmul.mubr.f32.gmra.mrb[0].mxu0 %v407
    %v500 = vpop.f32.mrb[0].mxu0
    %v501 = vadd.f32 %v432, %v500
    %v502 = vpop.f32.mrb[0].mxu0
    %503 = vmatprep.mubr.f32.mxu0 0.0
    %504 = vmatmul.mubr.f32.gmra.mrb[0].mxu0 %v408
    %v505 = vpop.f32.mrb[0].mxu0
    %v506 = vadd.f32 %v432, %v505
    %v507 = vpop.f32.mrb[0].mxu0
    %508 = vdwg.mxu0
    %509 = vst [vmem:[#allocation11] sm:$0xff] %v501
    %510 = vst [vmem:[#allocation11 + $0x8] sm:$0xff] %v506
    // Predicated region
    $region38: #{tpu_custom_call.1} parent=1 // pred_check
      _
    $region39: #{tpu_custom_call.1} parent=1 // pred_check_branch
      %512 = sbr.rel (0) target = $region41
    $region40: #{tpu_custom_call.1} parent=1 // pred_region
      %s514 = ssub.s32 256, 256
      %515 = vsyncadd [#allocation8], %s514
      %s516 = sshll.u32 [#allocation11], 4
      %s517 = int_to_ptr.vmem [resolvable:$true] %s516
      %522 = dma.vmem_to_hbm [thread:$0]  %s517, 256, %s7, [#allocation8], 128, 128, 8
    $region41: #{tpu_custom_call.1} parent=1 // pred_fallthru
      _
    // Predicated region
    $region42: #{tpu_custom_call.1} parent=1 // pred_check
      _
    $region43: #{tpu_custom_call.1} parent=1 // pred_check_branch
      %524 = sbr.rel (0) target = $region45
    $region44: #{tpu_custom_call.1} parent=1 // pred_region
      %525 = dma.done [#allocation8], 256
    $region45: #{tpu_custom_call.1} parent=1 // pred_fallthru
      _
    %526 = vsyncpa [#allocation7], 1
    %527 = vsyncpa [#allocation10], 1
    %528 = vsyncpa [#allocation8], 1
  %529 = vsyncmov [#allocation5]
  %s530 = vpop.sfrf %529
  %p531 = scmp.eq.s32.totalorder %s530, 0
  %p532 = pneg %p531
  %534 = shalt.err (%p532)
  %s535 = scalar_lea.sflag [#allocation5], 1
  %536 = vsyncmov %s535
  %s537 = vpop.sfrf %536
  %p538 = scmp.eq.s32.totalorder %s537, 0
  %p539 = pneg %p538
  %541 = shalt.err (%p539)
  %s542 = scalar_lea.sflag [#allocation5], 2
  %543 = vsyncmov %s542
  %s544 = vpop.sfrf %543
  %p545 = scmp.eq.s32.totalorder %s544, 0
  %p546 = pneg %p545
  %548 = shalt.err (%p546)

</llo_original>
